<compile_context>
chip_gen: v6e
topology: v6e:2x2x1
jax: 0.10.0
libtpu: 0.0.40
codegen_flags: <defaults>
</compile_context>

<pallas_src>
import numpy as np
import jax
import jax.numpy as jnp
from jax.experimental import pallas as pl
from jax.experimental.pallas import tpu as pltpu

_SQRT_2_OVER_PI = 0.7978845608028654
_GELU_COEF = 0.044715


def _gelu(v):
    # tanh-approximate GELU (torch.nn.GELU(approximate='tanh')); the tanh sits
    # on the EUP slot, leaving the VALU nearly free.  |err| vs exact-erf GELU
    # is ~5e-4 per element at worst.
    return 0.5 * v * (1.0 + jnp.tanh(_SQRT_2_OVER_PI * (v + _GELU_COEF * v * v * v)))


def qflow_kernel(x_ref, t_ref, y_ref, vec_ref,
                 w1y_ref, w2y_ref,
                 wx1x_ref, wx1tc_ref, wx1y_ref,
                 wx2_ref, wo1_ref, wo2_ref,
                 out_ref):
    f32 = jnp.float32
    H = wx2_ref.shape[0]          # hidden_dim (static)

    # Packed small vectors: one (16, 128) load, static row slices.
    vecs = vec_ref[...]
    harm2 = vecs[0:1, :]          # [h, h]                     (1,128)
    phase = vecs[1:2, :]          # [0*64, (pi/2)*64]          (1,128)
    b1y = vecs[2:3, :]
    b2y = vecs[3:4, :]
    bx1 = vecs[4:5, :H]
    bx2 = vecs[5:6, :H]
    bo1 = vecs[6:7, :H]
    ln_g = vecs[7:8, :H]
    ln_b = vecs[8:9, :H]
    bo2 = vecs[9:10, :]           # zero-padded beyond x_dim   (1,128)

    # Fused Fourier time embedding: lanes 0-63 = sin(t*h), 64-127 = cos(t*h)
    # (cos realized as sin(theta + pi/2) so a single [B,128] operand feeds one
    # matmul instead of two 64-wide ones).
    tf = jnp.sin(t_ref[...] * harm2 + phase)                       # (B,128)

    # y_embedding: Linear -> GELU -> Linear.
    if y_ref.shape[-1] == 1:
        # y_dim == 1: first layer is an outer product -> VPU broadcast-multiply.
        h = y_ref[...] * w1y_ref[...] + b1y                        # (B,128)
    else:
        h = jnp.dot(y_ref[...], w1y_ref[...], preferred_element_type=f32) + b1y
    h = _gelu(h)
    y_emb = jnp.dot(h, w2y_ref[...], preferred_element_type=f32) + b2y

    # x_model on concat([x, sin, cos, y_emb], 1), realized as a split matmul
    # (sum of partial products over the pre-split weight) -- mathematically
    # identical, no lane-concat shuffles.
    z = (jnp.dot(x_ref[...], wx1x_ref[...], preferred_element_type=f32)
         + jnp.dot(tf, wx1tc_ref[...], preferred_element_type=f32)
         + jnp.dot(y_emb, wx1y_ref[...], preferred_element_type=f32)
         + bx1)
    z = _gelu(z)
    z = _gelu(jnp.dot(z, wx2_ref[...], preferred_element_type=f32) + bx2)

    # out_model: Linear -> LayerNorm -> GELU -> Linear (output lane-padded to 128).
    o = jnp.dot(z, wo1_ref[...], preferred_element_type=f32) + bo1
    mu = jnp.mean(o, axis=-1, keepdims=True)
    var = jnp.mean(jnp.square(o - mu), axis=-1, keepdims=True)
    o = (o - mu) * jax.lax.rsqrt(var + 1e-5) * ln_g + ln_b
    o = _gelu(o)
    out_ref[...] = (jnp.dot(o, wo2_ref[...], preferred_element_type=f32)
                    + bo2).astype(out_ref.dtype)


def init_params(key, x_dim, hidden_dim, y_dim, dtype=jnp.float32):
    """Deterministic synthetic parameters (PyTorch-Linear-style uniform init)."""
    ks = jax.random.split(key, 6)

    def lin(k, fan_in, fan_out):
        bound = 1.0 / np.sqrt(fan_in)
        kw, kb = jax.random.split(k)
        w = jax.random.uniform(kw, (fan_in, fan_out), dtype, -bound, bound)
        b = jax.random.uniform(kb, (fan_out,), dtype, -bound, bound)
        return w, b

    p = {}
    p['harmonics'] = jnp.arange(1, 64 + 1, dtype=dtype) * 2.0 * np.pi
    p['w1y'], p['b1y'] = lin(ks[0], y_dim, 128)
    p['w2y'], p['b2y'] = lin(ks[1], 128, 128)
    p['wx1'], p['bx1'] = lin(ks[2], x_dim + 128 + 128, hidden_dim)
    p['wx2'], p['bx2'] = lin(ks[3], hidden_dim, hidden_dim)
    p['wo1'], p['bo1'] = lin(ks[4], hidden_dim, hidden_dim)
    p['ln_g'] = jnp.ones((hidden_dim,), dtype)
    p['ln_b'] = jnp.zeros((hidden_dim,), dtype)
    p['wo2'], p['bo2'] = lin(ks[5], hidden_dim, x_dim)
    return p
    # TODO(synk): means_scaling_model params are unused in forward() and omitted.


def prepare_params(params, x_dim, hidden_dim, y_dim):
    """One-time conversion to kernel-ready arrays (packing / splitting / padding).

    Runs once; nothing here appears in the per-call path.
    """
    f32 = jnp.float32
    H = hidden_dim

    def put(buf, r, v):
        v = jnp.asarray(v, f32)
        return buf.at[r, :v.shape[0]].set(v)

    harm = jnp.asarray(params['harmonics'], f32)
    vecs = jnp.zeros((16, 128), f32)
    vecs = vecs.at[0, :].set(jnp.concatenate([harm, harm]))            # harmonics x2
    vecs = vecs.at[1, 64:].set(jnp.full((64,), 0.5 * np.pi, f32))      # phase (cos half)
    vecs = put(vecs, 2, params['b1y'])
    vecs = put(vecs, 3, params['b2y'])
    vecs = put(vecs, 4, params['bx1'])
    vecs = put(vecs, 5, params['bx2'])
    vecs = put(vecs, 6, params['bo1'])
    vecs = put(vecs, 7, params['ln_g'])
    vecs = put(vecs, 8, params['ln_b'])
    vecs = put(vecs, 9, params['bo2'])                                 # lane-padded bo2

    wx1 = jnp.asarray(params['wx1'], f32)
    wo2p = jnp.zeros((H, 128), f32).at[:, :x_dim].set(jnp.asarray(params['wo2'], f32))

    return {
        'vecs': vecs,                                  # (16, 128) packed vectors
        'w1y': jnp.asarray(params['w1y'], f32),        # (y_dim, 128)
        'w2y': jnp.asarray(params['w2y'], f32),        # (128, 128)
        'wx1x': wx1[:x_dim],                           # (x_dim, H)
        'wx1tc': wx1[x_dim:x_dim + 128],               # (128, H)  [sin|cos] rows
        'wx1y': wx1[x_dim + 128:],                     # (128, H)
        'wx2': jnp.asarray(params['wx2'], f32),        # (H, H)
        'wo1': jnp.asarray(params['wo1'], f32),        # (H, H)
        'wo2p': wo2p,                                  # (H, 128) zero-padded cols
    }


@jax.jit
def conditional_qflow_forward(prep, x, t, y):
    B, x_dim = x.shape
    f32 = jnp.float32

    args = (x.astype(f32), t.reshape(B, 1).astype(f32), y.astype(f32),
            prep['vecs'], prep['w1y'], prep['w2y'],
            prep['wx1x'], prep['wx1tc'], prep['wx1y'],
            prep['wx2'], prep['wo1'], prep['wo2p'])

    vmem = pl.BlockSpec(memory_space=pltpu.MemorySpace.VMEM)
    out_pad = pl.pallas_call(
        qflow_kernel,
        out_shape=jax.ShapeDtypeStruct((B, 128), f32),   # lane-dense store
        in_specs=[vmem] * len(args),
        out_specs=vmem,
    )(*args)
    return out_pad[:, :x_dim]


def reference_forward(params, x, t, y, *, exact_gelu=True):
    """Pure-JAX reference mirroring the PyTorch forward.

    exact_gelu=True  -> torch.nn.GELU() (erf) parity.
    exact_gelu=False -> same tanh-approximate GELU the kernel uses.
    """
    gelu = lambda v: jax.nn.gelu(v, approximate=not exact_gelu)
    th = t[:, None] * params['harmonics'][None, :]
    t_emb = jnp.concatenate([jnp.sin(th), jnp.cos(th)], axis=1)
    h = gelu(y @ params['w1y'] + params['b1y'])
    y_emb = h @ params['w2y'] + params['b2y']
    z = jnp.concatenate([x, t_emb, y_emb], axis=1)
    z = gelu(z @ params['wx1'] + params['bx1'])
    z = gelu(z @ params['wx2'] + params['bx2'])
    o = z @ params['wo1'] + params['bo1']
    mu = o.mean(-1, keepdims=True)
    var = ((o - mu) ** 2).mean(-1, keepdims=True)
    o = (o - mu) / jnp.sqrt(var + 1e-5) * params['ln_g'] + params['ln_b']
    o = gelu(o)
    return o @ params['wo2'] + params['bo2']


if __name__ == "__main__":
    B, X_DIM, HIDDEN, Y_DIM = 8, 16, 32, 1

    key = jax.random.PRNGKey(0)
    kp, kx, kt, ky = jax.random.split(key, 4)
    params = init_params(kp, X_DIM, HIDDEN, Y_DIM)
    prep = prepare_params(params, X_DIM, HIDDEN, Y_DIM)   # one-time prep

    x = jax.random.normal(kx, (B, X_DIM), jnp.float32)
    t = jax.random.uniform(kt, (B,), jnp.float32)
    y = jax.random.normal(ky, (B, Y_DIM), jnp.float32)

    out = conditional_qflow_forward(prep, x, t, y)
    out = jax.block_until_ready(out)
    assert out.shape == (B, X_DIM), out.shape

    # Tight structural check against a reference using the same tanh-GELU.
    ref_tanh = reference_forward(params, x, t, y, exact_gelu=False)
    np.testing.assert_allclose(np.asarray(out), np.asarray(ref_tanh),
                               rtol=2e-4, atol=2e-4)
    # Parity check against torch's exact-erf GELU; the looser tolerance covers
    # the tanh-GELU approximation (~5e-4/element before propagation).
    ref_exact = reference_forward(params, x, t, y, exact_gelu=True)
    np.testing.assert_allclose(np.asarray(out), np.asarray(ref_exact),
                               rtol=5e-3, atol=5e-3)
    print("KERNEL_OK")
</pallas_src>

<mosaic_0001>
module attributes {stable_mosaic.version = 11 : i64} {
  func.func @qflow_kernel(%arg0: memref<8x16xf32, #tpu.memory_space<vmem>>, %arg1: memref<8x1xf32, #tpu.memory_space<vmem>>, %arg2: memref<8x1xf32, #tpu.memory_space<vmem>>, %arg3: memref<16x128xf32, #tpu.memory_space<vmem>>, %arg4: memref<1x128xf32, #tpu.memory_space<vmem>>, %arg5: memref<128x128xf32, #tpu.memory_space<vmem>>, %arg6: memref<16x32xf32, #tpu.memory_space<vmem>>, %arg7: memref<128x32xf32, #tpu.memory_space<vmem>>, %arg8: memref<128x32xf32, #tpu.memory_space<vmem>>, %arg9: memref<32x32xf32, #tpu.memory_space<vmem>>, %arg10: memref<32x32xf32, #tpu.memory_space<vmem>>, %arg11: memref<32x128xf32, #tpu.memory_space<vmem>>, %arg12: memref<8x128xf32, #tpu.memory_space<vmem>>) attributes {dimension_semantics = [], scalar_prefetch = 0 : i64, scratch_operands = 0 : i64, tpu.core_type = #tpu.core_type<tc>} {
    %c0 = arith.constant 0 : index
    %c0_0 = arith.constant 0 : index
    %0 = vector.load %arg3[%c0, %c0_0] : memref<16x128xf32, #tpu.memory_space<vmem>>, vector<16x128xf32>
    %1 = vector.extract_strided_slice %0 {offsets = [0, 0], sizes = [1, 128], strides = [1, 1]} : vector<16x128xf32> to vector<1x128xf32>
    %2 = vector.extract_strided_slice %0 {offsets = [1, 0], sizes = [1, 128], strides = [1, 1]} : vector<16x128xf32> to vector<1x128xf32>
    %3 = vector.extract_strided_slice %0 {offsets = [2, 0], sizes = [1, 128], strides = [1, 1]} : vector<16x128xf32> to vector<1x128xf32>
    %4 = vector.extract_strided_slice %0 {offsets = [3, 0], sizes = [1, 128], strides = [1, 1]} : vector<16x128xf32> to vector<1x128xf32>
    %5 = vector.extract_strided_slice %0 {offsets = [4, 0], sizes = [1, 32], strides = [1, 1]} : vector<16x128xf32> to vector<1x32xf32>
    %6 = vector.extract_strided_slice %0 {offsets = [5, 0], sizes = [1, 32], strides = [1, 1]} : vector<16x128xf32> to vector<1x32xf32>
    %7 = vector.extract_strided_slice %0 {offsets = [6, 0], sizes = [1, 32], strides = [1, 1]} : vector<16x128xf32> to vector<1x32xf32>
    %8 = vector.extract_strided_slice %0 {offsets = [7, 0], sizes = [1, 32], strides = [1, 1]} : vector<16x128xf32> to vector<1x32xf32>
    %9 = vector.extract_strided_slice %0 {offsets = [8, 0], sizes = [1, 32], strides = [1, 1]} : vector<16x128xf32> to vector<1x32xf32>
    %10 = vector.extract_strided_slice %0 {offsets = [9, 0], sizes = [1, 128], strides = [1, 1]} : vector<16x128xf32> to vector<1x128xf32>
    %c0_1 = arith.constant 0 : index
    %c0_2 = arith.constant 0 : index
    %11 = vector.load %arg1[%c0_1, %c0_2] : memref<8x1xf32, #tpu.memory_space<vmem>>, vector<8x1xf32>
    %12 = vector.broadcast %11 : vector<8x1xf32> to vector<8x128xf32>
    %13 = vector.broadcast %1 : vector<1x128xf32> to vector<8x128xf32>
    %14 = arith.mulf %12, %13 : vector<8x128xf32>
    %15 = vector.broadcast %2 : vector<1x128xf32> to vector<8x128xf32>
    %16 = arith.addf %14, %15 : vector<8x128xf32>
    %17 = math.sin %16 : vector<8x128xf32>
    %c0_3 = arith.constant 0 : index
    %c0_4 = arith.constant 0 : index
    %18 = vector.load %arg2[%c0_3, %c0_4] : memref<8x1xf32, #tpu.memory_space<vmem>>, vector<8x1xf32>
    %c0_5 = arith.constant 0 : index
    %c0_6 = arith.constant 0 : index
    %19 = vector.load %arg4[%c0_5, %c0_6] : memref<1x128xf32, #tpu.memory_space<vmem>>, vector<1x128xf32>
    %20 = vector.broadcast %18 : vector<8x1xf32> to vector<8x128xf32>
    %21 = vector.broadcast %19 : vector<1x128xf32> to vector<8x128xf32>
    %22 = arith.mulf %20, %21 : vector<8x128xf32>
    %23 = vector.broadcast %3 : vector<1x128xf32> to vector<8x128xf32>
    %24 = arith.addf %22, %23 : vector<8x128xf32>
    %cst = arith.constant 5.000000e-01 : f32
    %25 = vector.broadcast %cst : f32 to vector<8x128xf32>
    %26 = arith.mulf %25, %24 : vector<8x128xf32>
    %cst_7 = arith.constant 4.471500e-02 : f32
    %27 = vector.broadcast %cst_7 : f32 to vector<8x128xf32>
    %28 = arith.mulf %27, %24 : vector<8x128xf32>
    %29 = arith.mulf %28, %24 : vector<8x128xf32>
    %30 = arith.mulf %29, %24 : vector<8x128xf32>
    %31 = arith.addf %24, %30 : vector<8x128xf32>
    %cst_8 = arith.constant 0.797884583 : f32
    %32 = vector.broadcast %cst_8 : f32 to vector<8x128xf32>
    %33 = arith.mulf %32, %31 : vector<8x128xf32>
    %34 = math.tanh %33 : vector<8x128xf32>
    %cst_9 = arith.constant 1.000000e+00 : f32
    %35 = vector.broadcast %cst_9 : f32 to vector<8x128xf32>
    %36 = arith.addf %35, %34 : vector<8x128xf32>
    %37 = arith.mulf %26, %36 : vector<8x128xf32>
    %c0_10 = arith.constant 0 : index
    %c0_11 = arith.constant 0 : index
    %38 = vector.load %arg5[%c0_10, %c0_11] : memref<128x128xf32, #tpu.memory_space<vmem>>, vector<128x128xf32>
    %cst_12 = arith.constant dense<0.000000e+00> : vector<8x128xf32>
    %39 = tpu.matmul %37, %38, %cst_12 {dimension_numbers = #tpu.dot_dimension_numbers<[1], [0], [0], [1], [0, 0, 1, 1], [], []>} : vector<8x128xf32>, vector<128x128xf32>, vector<8x128xf32> -> vector<8x128xf32>
    %40 = vector.broadcast %4 : vector<1x128xf32> to vector<8x128xf32>
    %41 = arith.addf %39, %40 : vector<8x128xf32>
    %c0_13 = arith.constant 0 : index
    %c0_14 = arith.constant 0 : index
    %42 = vector.load %arg0[%c0_13, %c0_14] : memref<8x16xf32, #tpu.memory_space<vmem>>, vector<8x16xf32>
    %c0_15 = arith.constant 0 : index
    %c0_16 = arith.constant 0 : index
    %43 = vector.load %arg6[%c0_15, %c0_16] : memref<16x32xf32, #tpu.memory_space<vmem>>, vector<16x32xf32>
    %cst_17 = arith.constant dense<0.000000e+00> : vector<8x32xf32>
    %44 = tpu.matmul %42, %43, %cst_17 {dimension_numbers = #tpu.dot_dimension_numbers<[1], [0], [0], [1], [0, 0, 1, 1], [], []>} : vector<8x16xf32>, vector<16x32xf32>, vector<8x32xf32> -> vector<8x32xf32>
    %c0_18 = arith.constant 0 : index
    %c0_19 = arith.constant 0 : index
    %45 = vector.load %arg7[%c0_18, %c0_19] : memref<128x32xf32, #tpu.memory_space<vmem>>, vector<128x32xf32>
    %cst_20 = arith.constant dense<0.000000e+00> : vector<8x32xf32>
    %46 = tpu.matmul %17, %45, %cst_20 {dimension_numbers = #tpu.dot_dimension_numbers<[1], [0], [0], [1], [0, 0, 1, 1], [], []>} : vector<8x128xf32>, vector<128x32xf32>, vector<8x32xf32> -> vector<8x32xf32>
    %47 = arith.addf %44, %46 : vector<8x32xf32>
    %c0_21 = arith.constant 0 : index
    %c0_22 = arith.constant 0 : index
    %48 = vector.load %arg8[%c0_21, %c0_22] : memref<128x32xf32, #tpu.memory_space<vmem>>, vector<128x32xf32>
    %cst_23 = arith.constant dense<0.000000e+00> : vector<8x32xf32>
    %49 = tpu.matmul %41, %48, %cst_23 {dimension_numbers = #tpu.dot_dimension_numbers<[1], [0], [0], [1], [0, 0, 1, 1], [], []>} : vector<8x128xf32>, vector<128x32xf32>, vector<8x32xf32> -> vector<8x32xf32>
    %50 = arith.addf %47, %49 : vector<8x32xf32>
    %51 = vector.broadcast %5 : vector<1x32xf32> to vector<8x32xf32>
    %52 = arith.addf %50, %51 : vector<8x32xf32>
    %cst_24 = arith.constant 5.000000e-01 : f32
    %53 = vector.broadcast %cst_24 : f32 to vector<8x32xf32>
    %54 = arith.mulf %53, %52 : vector<8x32xf32>
    %cst_25 = arith.constant 4.471500e-02 : f32
    %55 = vector.broadcast %cst_25 : f32 to vector<8x32xf32>
    %56 = arith.mulf %55, %52 : vector<8x32xf32>
    %57 = arith.mulf %56, %52 : vector<8x32xf32>
    %58 = arith.mulf %57, %52 : vector<8x32xf32>
    %59 = arith.addf %52, %58 : vector<8x32xf32>
    %cst_26 = arith.constant 0.797884583 : f32
    %60 = vector.broadcast %cst_26 : f32 to vector<8x32xf32>
    %61 = arith.mulf %60, %59 : vector<8x32xf32>
    %62 = math.tanh %61 : vector<8x32xf32>
    %cst_27 = arith.constant 1.000000e+00 : f32
    %63 = vector.broadcast %cst_27 : f32 to vector<8x32xf32>
    %64 = arith.addf %63, %62 : vector<8x32xf32>
    %65 = arith.mulf %54, %64 : vector<8x32xf32>
    %c0_28 = arith.constant 0 : index
    %c0_29 = arith.constant 0 : index
    %66 = vector.load %arg9[%c0_28, %c0_29] : memref<32x32xf32, #tpu.memory_space<vmem>>, vector<32x32xf32>
    %cst_30 = arith.constant dense<0.000000e+00> : vector<8x32xf32>
    %67 = tpu.matmul %65, %66, %cst_30 {dimension_numbers = #tpu.dot_dimension_numbers<[1], [0], [0], [1], [0, 0, 1, 1], [], []>} : vector<8x32xf32>, vector<32x32xf32>, vector<8x32xf32> -> vector<8x32xf32>
    %68 = vector.broadcast %6 : vector<1x32xf32> to vector<8x32xf32>
    %69 = arith.addf %67, %68 : vector<8x32xf32>
    %cst_31 = arith.constant 5.000000e-01 : f32
    %70 = vector.broadcast %cst_31 : f32 to vector<8x32xf32>
    %71 = arith.mulf %70, %69 : vector<8x32xf32>
    %cst_32 = arith.constant 4.471500e-02 : f32
    %72 = vector.broadcast %cst_32 : f32 to vector<8x32xf32>
    %73 = arith.mulf %72, %69 : vector<8x32xf32>
    %74 = arith.mulf %73, %69 : vector<8x32xf32>
    %75 = arith.mulf %74, %69 : vector<8x32xf32>
    %76 = arith.addf %69, %75 : vector<8x32xf32>
    %cst_33 = arith.constant 0.797884583 : f32
    %77 = vector.broadcast %cst_33 : f32 to vector<8x32xf32>
    %78 = arith.mulf %77, %76 : vector<8x32xf32>
    %79 = math.tanh %78 : vector<8x32xf32>
    %cst_34 = arith.constant 1.000000e+00 : f32
    %80 = vector.broadcast %cst_34 : f32 to vector<8x32xf32>
    %81 = arith.addf %80, %79 : vector<8x32xf32>
    %82 = arith.mulf %71, %81 : vector<8x32xf32>
    %c0_35 = arith.constant 0 : index
    %c0_36 = arith.constant 0 : index
    %83 = vector.load %arg10[%c0_35, %c0_36] : memref<32x32xf32, #tpu.memory_space<vmem>>, vector<32x32xf32>
    %cst_37 = arith.constant dense<0.000000e+00> : vector<8x32xf32>
    %84 = tpu.matmul %82, %83, %cst_37 {dimension_numbers = #tpu.dot_dimension_numbers<[1], [0], [0], [1], [0, 0, 1, 1], [], []>} : vector<8x32xf32>, vector<32x32xf32>, vector<8x32xf32> -> vector<8x32xf32>
    %85 = vector.broadcast %7 : vector<1x32xf32> to vector<8x32xf32>
    %86 = arith.addf %84, %85 : vector<8x32xf32>
    %cst_38 = arith.constant dense<0.000000e+00> : vector<8xf32>
    %87 = vector.multi_reduction <add>, %86, %cst_38 [1] : vector<8x32xf32> to vector<8xf32>
    %88 = vector.shape_cast %87 : vector<8xf32> to vector<8x1xf32>
    %cst_39 = arith.constant 3.200000e+01 : f32
    %89 = vector.broadcast %cst_39 : f32 to vector<8x1xf32>
    %90 = arith.divf %88, %89 : vector<8x1xf32>
    %91 = vector.broadcast %90 : vector<8x1xf32> to vector<8x32xf32>
    %92 = arith.subf %86, %91 : vector<8x32xf32>
    %93 = arith.mulf %92, %92 : vector<8x32xf32>
    %cst_40 = arith.constant dense<0.000000e+00> : vector<8xf32>
    %94 = vector.multi_reduction <add>, %93, %cst_40 [1] : vector<8x32xf32> to vector<8xf32>
    %95 = vector.shape_cast %94 : vector<8xf32> to vector<8x1xf32>
    %cst_41 = arith.constant 3.200000e+01 : f32
    %96 = vector.broadcast %cst_41 : f32 to vector<8x1xf32>
    %97 = arith.divf %95, %96 : vector<8x1xf32>
    %98 = vector.broadcast %90 : vector<8x1xf32> to vector<8x32xf32>
    %99 = arith.subf %86, %98 : vector<8x32xf32>
    %cst_42 = arith.constant 9.99999974E-6 : f32
    %100 = vector.broadcast %cst_42 : f32 to vector<8x1xf32>
    %101 = arith.addf %97, %100 : vector<8x1xf32>
    %102 = math.rsqrt %101 : vector<8x1xf32>
    %103 = vector.broadcast %102 : vector<8x1xf32> to vector<8x32xf32>
    %104 = arith.mulf %99, %103 : vector<8x32xf32>
    %105 = vector.broadcast %8 : vector<1x32xf32> to vector<8x32xf32>
    %106 = arith.mulf %104, %105 : vector<8x32xf32>
    %107 = vector.broadcast %9 : vector<1x32xf32> to vector<8x32xf32>
    %108 = arith.addf %106, %107 : vector<8x32xf32>
    %cst_43 = arith.constant 5.000000e-01 : f32
    %109 = vector.broadcast %cst_43 : f32 to vector<8x32xf32>
    %110 = arith.mulf %109, %108 : vector<8x32xf32>
    %cst_44 = arith.constant 4.471500e-02 : f32
    %111 = vector.broadcast %cst_44 : f32 to vector<8x32xf32>
    %112 = arith.mulf %111, %108 : vector<8x32xf32>
    %113 = arith.mulf %112, %108 : vector<8x32xf32>
    %114 = arith.mulf %113, %108 : vector<8x32xf32>
    %115 = arith.addf %108, %114 : vector<8x32xf32>
    %cst_45 = arith.constant 0.797884583 : f32
    %116 = vector.broadcast %cst_45 : f32 to vector<8x32xf32>
    %117 = arith.mulf %116, %115 : vector<8x32xf32>
    %118 = math.tanh %117 : vector<8x32xf32>
    %cst_46 = arith.constant 1.000000e+00 : f32
    %119 = vector.broadcast %cst_46 : f32 to vector<8x32xf32>
    %120 = arith.addf %119, %118 : vector<8x32xf32>
    %121 = arith.mulf %110, %120 : vector<8x32xf32>
    %c0_47 = arith.constant 0 : index
    %c0_48 = arith.constant 0 : index
    %122 = vector.load %arg11[%c0_47, %c0_48] : memref<32x128xf32, #tpu.memory_space<vmem>>, vector<32x128xf32>
    %cst_49 = arith.constant dense<0.000000e+00> : vector<8x128xf32>
    %123 = tpu.matmul %121, %122, %cst_49 {dimension_numbers = #tpu.dot_dimension_numbers<[1], [0], [0], [1], [0, 0, 1, 1], [], []>} : vector<8x32xf32>, vector<32x128xf32>, vector<8x128xf32> -> vector<8x128xf32>
    %124 = vector.broadcast %10 : vector<1x128xf32> to vector<8x128xf32>
    %125 = arith.addf %123, %124 : vector<8x128xf32>
    %c0_50 = arith.constant 0 : index
    %c0_51 = arith.constant 0 : index
    %126 = vector.load %arg12[%c0_50, %c0_51] : memref<8x128xf32, #tpu.memory_space<vmem>>, vector<8x128xf32>
    tpu.vector_store %arg12[%c0_50, %c0_51], %125 {strides = array<i32>} : memref<8x128xf32, #tpu.memory_space<vmem>>, vector<8x128xf32>,
    return
  }
}

</mosaic_0001>

<llo_original>
// kernel: conditional_qflow_forward.1
$region0: #{conditional_qflow_forward.1}
  #allocation0 [shape = 'u32[]', space=smem, size = 0x4, offset = 0x4, fixed_abs, tag = 'smem constant byte address 0x4 - core index']
  #allocation1 [shape = 'u32[144,128]{1,0:T(1,128)}', space=vmem, size = 0x12000, scoped, tag = 'internal scratch']
  %s0 = inlined_call_operand.vmem [shape: f32[8,16], index: 0, kind: input, shape index: {}]
  %s1 = inlined_call_operand.vmem [shape: f32[8,1], index: 1, kind: input, shape index: {}]
  %s2 = inlined_call_operand.vmem [shape: f32[8,1], index: 2, kind: input, shape index: {}]
  %s3 = inlined_call_operand.vmem [shape: f32[16,128], index: 3, kind: input, shape index: {}]
  %s4 = inlined_call_operand.vmem [shape: f32[1,128], index: 4, kind: input, shape index: {}]
  %s5 = inlined_call_operand.vmem [shape: f32[128,128], index: 5, kind: input, shape index: {}]
  %s6 = inlined_call_operand.vmem [shape: f32[16,32], index: 6, kind: input, shape index: {}]
  %s7 = inlined_call_operand.vmem [shape: f32[128,32], index: 7, kind: input, shape index: {}]
  %s8 = inlined_call_operand.vmem [shape: f32[128,32], index: 8, kind: input, shape index: {}]
  %s9 = inlined_call_operand.vmem [shape: f32[32,32], index: 9, kind: input, shape index: {}]
  %s10 = inlined_call_operand.vmem [shape: f32[32,32], index: 10, kind: input, shape index: {}]
  %s11 = inlined_call_operand.vmem [shape: f32[32,128], index: 11, kind: input, shape index: {}]
  %s12 = inlined_call_operand.hbm [shape: f32[8,128], index: 12, kind: output, shape index: {}]
  %s13 = sld [smem:[#allocation0]]
  $region58: #{conditional_qflow_forward.1} parent=0
    _
  %s15 = ssub.s32 1, %s13
  %s16 = scalar_select 0, %s15, %s13
  $region1: #{conditional_qflow_forward.1} parent=0
    #allocation2 [shape = 'u8[4096]{0}', space=vmem, size = 0x1000, scoped, tag = 'output window, operand 0, single buffered']
    #allocation3 [shape = 's32[1]{0}', space=sflag, size = 0x4, scoped, tag = 'scoped memory for conditional_qflow_forward.1']
    %17 = vsyncpa [#allocation3], 0
    // Predicated region
    $region2: #{conditional_qflow_forward.1} parent=1 // pred_check
      _
    $region3: #{conditional_qflow_forward.1} parent=1 // pred_check_branch
      %19 = sbr.rel (0) target = $region5
    $region4: #{conditional_qflow_forward.1} parent=1 // pred_region
      _
    $region5: #{conditional_qflow_forward.1} parent=1 // pred_fallthru
      _
    // Predicated region
    $region6: #{conditional_qflow_forward.1} parent=1 // pred_check
      _
    $region7: #{conditional_qflow_forward.1} parent=1 // pred_check_branch
      %21 = sbr.rel (0) target = $region9
    $region8: #{conditional_qflow_forward.1} parent=1 // pred_region
      _
    $region9: #{conditional_qflow_forward.1} parent=1 // pred_fallthru
      _
    // Predicated region
    $region10: #{conditional_qflow_forward.1} parent=1 // pred_check
      _
    $region11: #{conditional_qflow_forward.1} parent=1 // pred_check_branch
      %23 = sbr.rel (0) target = $region13
    $region12: #{conditional_qflow_forward.1} parent=1 // pred_region
      _
    $region13: #{conditional_qflow_forward.1} parent=1 // pred_fallthru
      _
    // Predicated region
    $region14: #{conditional_qflow_forward.1} parent=1 // pred_check
      _
    $region15: #{conditional_qflow_forward.1} parent=1 // pred_check_branch
      %25 = sbr.rel (0) target = $region17
    $region16: #{conditional_qflow_forward.1} parent=1 // pred_region
      _
    $region17: #{conditional_qflow_forward.1} parent=1 // pred_fallthru
      _
    // Predicated region
    $region18: #{conditional_qflow_forward.1} parent=1 // pred_check
      _
    $region19: #{conditional_qflow_forward.1} parent=1 // pred_check_branch
      %27 = sbr.rel (0) target = $region21
    $region20: #{conditional_qflow_forward.1} parent=1 // pred_region
      _
    $region21: #{conditional_qflow_forward.1} parent=1 // pred_fallthru
      _
    // Predicated region
    $region22: #{conditional_qflow_forward.1} parent=1 // pred_check
      _
    $region23: #{conditional_qflow_forward.1} parent=1 // pred_check_branch
      %29 = sbr.rel (0) target = $region25
    $region24: #{conditional_qflow_forward.1} parent=1 // pred_region
      _
    $region25: #{conditional_qflow_forward.1} parent=1 // pred_fallthru
      _
    // Predicated region
    $region26: #{conditional_qflow_forward.1} parent=1 // pred_check
      _
    $region27: #{conditional_qflow_forward.1} parent=1 // pred_check_branch
      %31 = sbr.rel (0) target = $region29
    $region28: #{conditional_qflow_forward.1} parent=1 // pred_region
      _
    $region29: #{conditional_qflow_forward.1} parent=1 // pred_fallthru
      _
    // Predicated region
    $region30: #{conditional_qflow_forward.1} parent=1 // pred_check
      _
    $region31: #{conditional_qflow_forward.1} parent=1 // pred_check_branch
      %33 = sbr.rel (0) target = $region33
    $region32: #{conditional_qflow_forward.1} parent=1 // pred_region
      _
    $region33: #{conditional_qflow_forward.1} parent=1 // pred_fallthru
      _
    // Predicated region
    $region34: #{conditional_qflow_forward.1} parent=1 // pred_check
      _
    $region35: #{conditional_qflow_forward.1} parent=1 // pred_check_branch
      %35 = sbr.rel (0) target = $region37
    $region36: #{conditional_qflow_forward.1} parent=1 // pred_region
      _
    $region37: #{conditional_qflow_forward.1} parent=1 // pred_fallthru
      _
    // Predicated region
    $region38: #{conditional_qflow_forward.1} parent=1 // pred_check
      _
    $region39: #{conditional_qflow_forward.1} parent=1 // pred_check_branch
      %37 = sbr.rel (0) target = $region41
    $region40: #{conditional_qflow_forward.1} parent=1 // pred_region
      _
    $region41: #{conditional_qflow_forward.1} parent=1 // pred_fallthru
      _
    // Predicated region
    $region42: #{conditional_qflow_forward.1} parent=1 // pred_check
      _
    $region43: #{conditional_qflow_forward.1} parent=1 // pred_check_branch
      %39 = sbr.rel (0) target = $region45
    $region44: #{conditional_qflow_forward.1} parent=1 // pred_region
      _
    $region45: #{conditional_qflow_forward.1} parent=1 // pred_fallthru
      _
    // Predicated region
    $region46: #{conditional_qflow_forward.1} parent=1 // pred_check
      _
    $region47: #{conditional_qflow_forward.1} parent=1 // pred_check_branch
      %41 = sbr.rel (0) target = $region49
    $region48: #{conditional_qflow_forward.1} parent=1 // pred_region
      _
    $region49: #{conditional_qflow_forward.1} parent=1 // pred_fallthru
      _
    %v42 = vld [vmem:[%s3] sm:$0xff]
    %v43 = vld [vmem:[%s3 + $0x8] sm:$0xff]
    %v44 = vld [vmem:[%s1] sm:$0xff]
    %46 = vset.pattern.permute.xlu0 0
    %47 = vperm.xlu0 %46, %v44
    %v48 = vpop.permute.xlu0 %47
    %v50 = vlaneseq
    %v51 = vshrl.u32 %v50, 7
    %v52 = vsub.s32 0, %v51
    %v53 = vrot.slane %v42, %v52
    %v54 = vmul.f32 %v48, %v53
    %v55 = vlaneseq
    %v56 = vshrl.u32 %v55, 7
    %v57 = vsub.s32 1, %v56
    %v58 = vrot.slane %v42, %v57
    %v59 = vadd.f32 %v54, %v58
    %v60 = vand.u32 2147483647, %v59
    %vm61 = vcmp.le.f32.partialorder %v60, 0.7853982
    %vm62 = vcmp.lt.s32.totalorder %v59, 0
    %v63 = vand.u32 %v59, 2139095040
    %v64 = vshrl.u32 %v63, 23
    %v65 = vsub.s32 %v64, 127
    %v66 = vand.u32 2147483647, %v59
    %v67 = vand.u32 %v66, 8388607
    %v68 = vor.u32 %v67, 8388608
    %v69 = vsub.s32 0, %v68
    %v70 = vadd.s32 %v65, 1
    %vm71 = vcmp.gt.s32.totalorder %v70, 0
    %v72 = vsel %vm71, %v70, 0
    %v73 = vshrl.u32 %v72, 5
    %v74 = vand.u32 %v72, 31
    %v75 = vsub.s32 32, %v74
    %v76 = vshrl.u32 683565275, %v75
    %v77 = vshll.u32 683565275, %v74
    %v78 = vshrl.u32 2475754826, %v75
    %v79 = vor.u32 %v77, %v78
    %v80 = vshll.u32 2475754826, %v74
    %v81 = vshrl.u32 2131351028, %v75
    %v82 = vor.u32 %v80, %v81
    %v83 = vshll.u32 2131351028, %v74
    %v84 = vshrl.u32 2102212464, %v75
    %v85 = vor.u32 %v83, %v84
    %v86 = vshll.u32 2102212464, %v74
    %v87 = vshrl.u32 920167782, %v75
    %v88 = vor.u32 %v86, %v87
    %v89 = vshll.u32 920167782, %v74
    %v90 = vshrl.u32 1326507024, %v75
    %v91 = vor.u32 %v89, %v90
    %vm92 = vcmp.lt.s32.totalorder %v73, 1
    %vm93 = vcmp.lt.s32.totalorder %v73, 2
    %vm94 = vcmp.lt.s32.totalorder %v73, 3
    %vm95 = vcmp.lt.s32.totalorder %v73, 4
    %v96 = vsel %vm92, %v76, %v79
    %v97 = vsel %vm95, %v85, 2102212464
    %v98 = vsel %vm94, %v82, %v97
    %v99 = vsel %vm93, %v96, %v98
    %v100 = vsel %vm92, %v79, %v82
    %v101 = vsel %vm95, %v88, 920167782
    %v102 = vsel %vm94, %v85, %v101
    %v103 = vsel %vm93, %v100, %v102
    %v104 = vsel %vm92, %v82, %v85
    %v105 = vsel %vm95, %v91, 1326507024
    %v106 = vsel %vm94, %v88, %v105
    %v107 = vsel %vm93, %v104, %v106
    %v108 = vshll.u32 %v68, 8
    %v109 = vmul.u32.u64.compose %v108, %v107
    %v110 = vextract.low.u32 %v109
    %v111 = vextract.high.u32 %v109
    %v112 = vmul.u32.u64.compose %v108, %v103
    %v113 = vextract.low.u32 %v112
    %v114 = vextract.high.u32 %v112
    %v115 = vmul.u32 %v108, %v99
    %v116 = vadd.s32 %v111, %v113
    %vm117 = vc.u32 %v111, %v113
    %v118 = vadd.s32 %v114, 1
    %v119 = vsel %vm117, %v118, %v114
    %v120 = vadd.s32 %v115, %v119
    %v121 = vadd.s32 %v120, 536870912
    %v122 = vshrl.u32 %v121, 30
    %v123 = vshll.u32 %v122, 30
    %v124 = vsub.s32 %v120, %v123
    %vm125 = vcmp.lt.s32.totalorder %v124, 0
    %v126 = vsub.s32 0, %v124
    %v127 = vsel %vm125, %v126, %v124
    %v128 = vclz %v127
    %v129 = vsub.s32 %v128, 2
    %vm130 = vcmp.gt.s32.totalorder 0, %v129
    %v131 = vsel %vm130, 0, %v129
    %v132 = vsub.s32 32, %v131
    %v133 = vshll.u32 %v124, %v131
    %v134 = vshrl.u32 %v116, %v132
    %v135 = vor.u32 %v133, %v134
    %v136 = vsub.s32 4294967266, %v131
    %v137 = vadd.s32 %v136, 127
    %v138 = vshll.u32 %v137, 23
    %v139 = vor.u32 4788187, %v138
    %v140 = vand.u32 2147483647, %v139
    %v142 = vcvt.s32.f32 %v135
    %v143 = vmul.f32 %v142, %v140
    %v144 = vxor.u32 %v143, 2147483648
    %v145 = vsel %vm62, %v144, %v143
    %v146 = vsub.s32 4, %v122
    %v147 = vsel %vm62, %v146, %v122
    %v148 = vsel %vm61, %v59, %v145
    %v149 = vsel %vm61, 0, %v147
    %v150 = vcosq.f32.pop %v148
    %v151 = vsinq.f32.pop %v148
    %vm152 = vweird.f32 %v59
    %v153 = vadd.s32 %v149, 3
    %v154 = vand.u32 %v153, 3
    %vm155 = vcmp.lt.s32.totalorder %v154, 2
    %vm156 = vcmp.eq.s32.totalorder %v154, 0
    %v157 = vxor.u32 %v151, 2147483648
    %v158 = vsel %vm156, %v150, %v157
    %vm159 = vcmp.eq.s32.totalorder %v154, 2
    %v160 = vxor.u32 %v150, 2147483648
    %v161 = vsel %vm159, %v160, %v151
    %v162 = vsel %vm155, %v158, %v161
    %v163 = vsel %vm152, nan, %v162
    %v164 = vld [vmem:[%s2] sm:$0xff]
    %v165 = vld [vmem:[%s4] sm:$0x1]
    %167 = vset.pattern.permute.xlu0 0
    %168 = vperm.xlu0 %167, %v164
    %v169 = vpop.permute.xlu0 %168
    %v172 = vlaneseq
    %v173 = vshrl.u32 %v172, 7
    %v174 = vsub.s32 0, %v173
    %v175 = vrot.slane %v165, %v174
    %v177 = vmul.f32 %v169, %v175
    %v178 = vlaneseq
    %v179 = vshrl.u32 %v178, 7
    %v180 = vsub.s32 2, %v179
    %v181 = vrot.slane %v42, %v180
    %v182 = vadd.f32 %v177, %v181
    %v183 = vmul.f32 %v182, 0.5
    %v184 = vmul.f32 %v182, 0.044715
    %v185 = vmul.f32 %v184, %v182
    %v186 = vmul.f32 %v185, %v182
    %v187 = vadd.f32 %v182, %v186
    %v188 = vmul.f32 %v187, 0.7978846
    %v189 = vtanh.pop %v188
    %v190 = vadd.f32 %v189, 1.0
    %v191 = vmul.f32 %v183, %v190
    %v192 = vld [vmem:[%s5] sm:$0xff]
    %v193 = vld [vmem:[%s5 + $0x8] sm:$0xff]
    %v194 = vld [vmem:[%s5 + $0x10] sm:$0xff]
    %v195 = vld [vmem:[%s5 + $0x18] sm:$0xff]
    %v196 = vld [vmem:[%s5 + $0x20] sm:$0xff]
    %v197 = vld [vmem:[%s5 + $0x28] sm:$0xff]
    %v198 = vld [vmem:[%s5 + $0x30] sm:$0xff]
    %v199 = vld [vmem:[%s5 + $0x38] sm:$0xff]
    %v200 = vld [vmem:[%s5 + $0x40] sm:$0xff]
    %v201 = vld [vmem:[%s5 + $0x48] sm:$0xff]
    %v202 = vld [vmem:[%s5 + $0x50] sm:$0xff]
    %v203 = vld [vmem:[%s5 + $0x58] sm:$0xff]
    %v204 = vld [vmem:[%s5 + $0x60] sm:$0xff]
    %v205 = vld [vmem:[%s5 + $0x68] sm:$0xff]
    %v206 = vld [vmem:[%s5 + $0x70] sm:$0xff]
    %v207 = vld [vmem:[%s5 + $0x78] sm:$0xff]
    %v208 = vlaneseq
    %v209 = vshrl.u32 %v208, 7
    %v210 = vsub.s32 3, %v209
    %v211 = vrot.slane %v42, %v210
    %212 = vmatprep.subr.mxu0 0.0
    %213 = vmatpush1.msra.mxu0 %v207
    %214 = vmatprep.subr.mxu0 0.0
    %215 = vmatpush1.msra.mxu0 %v206
    %216 = vmatprep.subr.mxu0 0.0
    %217 = vmatpush1.msra.mxu0 %v205
    %218 = vmatprep.subr.mxu0 0.0
    %219 = vmatpush1.msra.mxu0 %v204
    %220 = vmatprep.subr.mxu0 0.0
    %221 = vmatpush1.msra.mxu0 %v203
    %222 = vmatprep.subr.mxu0 0.0
    %223 = vmatpush1.msra.mxu0 %v202
    %224 = vmatprep.subr.mxu0 0.0
    %225 = vmatpush1.msra.mxu0 %v201
    %226 = vmatprep.subr.mxu0 0.0
    %227 = vmatpush1.msra.mxu0 %v200
    %228 = vmatprep.subr.mxu0 0.0
    %229 = vmatpush1.msra.mxu0 %v199
    %230 = vmatprep.subr.mxu0 0.0
    %231 = vmatpush1.msra.mxu0 %v198
    %232 = vmatprep.subr.mxu0 0.0
    %233 = vmatpush1.msra.mxu0 %v197
    %234 = vmatprep.subr.mxu0 0.0
    %235 = vmatpush1.msra.mxu0 %v196
    %236 = vmatprep.subr.mxu0 0.0
    %237 = vmatpush1.msra.mxu0 %v195
    %238 = vmatprep.subr.mxu0 0.0
    %239 = vmatpush1.msra.mxu0 %v194
    %240 = vmatprep.subr.mxu0 0.0
    %241 = vmatpush1.msra.mxu0 %v193
    %242 = vmatprep.subr.mxu0 0.0
    %243 = vmatpush1.msra.mxu0 %v192
    %244 = vmatprep.subr.mxu0 0.0
    %245 = vmatpush2.msra.mxu0 0.0
    %246 = vmatprep.subr.mxu0 0.0
    %247 = vmatpush2.msra.mxu0 0.0
    %248 = vmatprep.subr.mxu0 0.0
    %249 = vmatpush2.msra.mxu0 0.0
    %250 = vmatprep.subr.mxu0 0.0
    %251 = vmatpush2.msra.mxu0 0.0
    %252 = vmatprep.subr.mxu0 0.0
    %253 = vmatpush2.msra.mxu0 0.0
    %254 = vmatprep.subr.mxu0 0.0
    %255 = vmatpush2.msra.mxu0 0.0
    %256 = vmatprep.subr.mxu0 0.0
    %257 = vmatpush2.msra.mxu0 0.0
    %258 = vmatprep.subr.mxu0 0.0
    %259 = vmatpush2.msra.mxu0 0.0
    %260 = vmatprep.subr.mxu0 0.0
    %261 = vmatpush2.msra.mxu0 0.0
    %262 = vmatprep.subr.mxu0 0.0
    %263 = vmatpush2.msra.mxu0 0.0
    %264 = vmatprep.subr.mxu0 0.0
    %265 = vmatpush2.msra.mxu0 0.0
    %266 = vmatprep.subr.mxu0 0.0
    %267 = vmatpush2.msra.mxu0 0.0
    %268 = vmatprep.subr.mxu0 0.0
    %269 = vmatpush2.msra.mxu0 0.0
    %270 = vmatprep.subr.mxu0 0.0
    %271 = vmatpush2.msra.mxu0 0.0
    %272 = vmatprep.subr.mxu0 0.0
    %273 = vmatpush2.msra.mxu0 0.0
    %274 = vmatprep.subr.mxu0 0.0
    %275 = vmatpush2.msra.mxu0 0.0
    %276 = vmatprep.mubr.f32.mxu0 0.0
    %277 = vmatmul.mubr.f32.gmra.mxu0 %v191
    %v278 = vpop.f32.mrf.mxu0
    %v279 = vadd.f32 %v211, %v278
    %v280 = vpop.f32.mrf.mxu0
    %281 = vdwg.mxu0
    %v282 = vld [vmem:[%s0] sm:$0xff]
    %v283 = vld [vmem:[%s6] sm:$0xff]
    %v284 = vld [vmem:[%s6 + $0x8] sm:$0xff]
    %v285 = vld [vmem:[%s7] sm:$0xff]
    %v286 = vld [vmem:[%s7 + $0x8] sm:$0xff]
    %v287 = vld [vmem:[%s7 + $0x10] sm:$0xff]
    %v288 = vld [vmem:[%s7 + $0x18] sm:$0xff]
    %v289 = vld [vmem:[%s7 + $0x20] sm:$0xff]
    %v290 = vld [vmem:[%s7 + $0x28] sm:$0xff]
    %v291 = vld [vmem:[%s7 + $0x30] sm:$0xff]
    %v292 = vld [vmem:[%s7 + $0x38] sm:$0xff]
    %v293 = vld [vmem:[%s7 + $0x40] sm:$0xff]
    %v294 = vld [vmem:[%s7 + $0x48] sm:$0xff]
    %v295 = vld [vmem:[%s7 + $0x50] sm:$0xff]
    %v296 = vld [vmem:[%s7 + $0x58] sm:$0xff]
    %v297 = vld [vmem:[%s7 + $0x60] sm:$0xff]
    %v298 = vld [vmem:[%s7 + $0x68] sm:$0xff]
    %v299 = vld [vmem:[%s7 + $0x70] sm:$0xff]
    %v300 = vld [vmem:[%s7 + $0x78] sm:$0xff]
    %301 = vmatprep.subr.mxu0 0.0
    %302 = vmatpush1.msra.mxu0 %v300
    %303 = vmatprep.subr.mxu0 0.0
    %304 = vmatpush1.msra.mxu0 %v299
    %305 = vmatprep.subr.mxu0 0.0
    %306 = vmatpush1.msra.mxu0 %v298
    %307 = vmatprep.subr.mxu0 0.0
    %308 = vmatpush1.msra.mxu0 %v297
    %309 = vmatprep.subr.mxu0 0.0
    %310 = vmatpush1.msra.mxu0 %v296
    %311 = vmatprep.subr.mxu0 0.0
    %312 = vmatpush1.msra.mxu0 %v295
    %313 = vmatprep.subr.mxu0 0.0
    %314 = vmatpush1.msra.mxu0 %v294
    %315 = vmatprep.subr.mxu0 0.0
    %316 = vmatpush1.msra.mxu0 %v293
    %317 = vmatprep.subr.mxu0 0.0
    %318 = vmatpush1.msra.mxu0 %v292
    %319 = vmatprep.subr.mxu0 0.0
    %320 = vmatpush1.msra.mxu0 %v291
    %321 = vmatprep.subr.mxu0 0.0
    %322 = vmatpush1.msra.mxu0 %v290
    %323 = vmatprep.subr.mxu0 0.0
    %324 = vmatpush1.msra.mxu0 %v289
    %325 = vmatprep.subr.mxu0 0.0
    %326 = vmatpush1.msra.mxu0 %v288
    %327 = vmatprep.subr.mxu0 0.0
    %328 = vmatpush1.msra.mxu0 %v287
    %329 = vmatprep.subr.mxu0 0.0
    %330 = vmatpush1.msra.mxu0 %v286
    %331 = vmatprep.subr.mxu0 0.0
    %332 = vmatpush1.msra.mxu0 %v285
    %333 = vmatprep.subr.mxu0 0.0
    %334 = vmatpush2.msra.mxu0 0.0
    %335 = vmatprep.subr.mxu0 0.0
    %336 = vmatpush2.msra.mxu0 0.0
    %337 = vmatprep.subr.mxu0 0.0
    %338 = vmatpush2.msra.mxu0 0.0
    %339 = vmatprep.subr.mxu0 0.0
    %340 = vmatpush2.msra.mxu0 0.0
    %341 = vmatprep.subr.mxu0 0.0
    %342 = vmatpush2.msra.mxu0 0.0
    %343 = vmatprep.subr.mxu0 0.0
    %344 = vmatpush2.msra.mxu0 0.0
    %345 = vmatprep.subr.mxu0 0.0
    %346 = vmatpush2.msra.mxu0 0.0
    %347 = vmatprep.subr.mxu0 0.0
    %348 = vmatpush2.msra.mxu0 0.0
    %349 = vmatprep.subr.mxu0 0.0
    %350 = vmatpush2.msra.mxu0 0.0
    %351 = vmatprep.subr.mxu0 0.0
    %352 = vmatpush2.msra.mxu0 0.0
    %353 = vmatprep.subr.mxu0 0.0
    %354 = vmatpush2.msra.mxu0 0.0
    %355 = vmatprep.subr.mxu0 0.0
    %356 = vmatpush2.msra.mxu0 0.0
    %357 = vmatprep.subr.mxu0 0.0
    %358 = vmatpush2.msra.mxu0 0.0
    %359 = vmatprep.subr.mxu0 0.0
    %360 = vmatpush2.msra.mxu0 0.0
    %361 = vmatprep.subr.mxu0 0.0
    %362 = vmatpush2.msra.mxu0 0.0
    %363 = vmatprep.subr.mxu0 0.0
    %364 = vmatpush2.msra.mxu0 0.0
    %365 = vmatprep.mubr.f32.mxu0 0.0
    %366 = vmatmul.mubr.f32.gmra.mxu0 %v163
    %v367 = vpop.f32.mrf.mxu0
    %v368 = vadd.f32 0.0, %v367
    %v369 = vpop.f32.mrf.mxu0
    %370 = vdwg.mxu0
    %vm371 = vcmask 130048
    %v373 = vsel %vm371, %v282, 0
    %375 = vmatprep.subr.mxu0 0.0
    %376 = vmatpush1.msra.mxu0 0.0
    %377 = vmatprep.subr.mxu0 0.0
    %378 = vmatpush1.msra.mxu0 0.0
    %379 = vmatprep.subr.mxu0 0.0
    %380 = vmatpush1.msra.mxu0 0.0
    %381 = vmatprep.subr.mxu0 0.0
    %382 = vmatpush1.msra.mxu0 0.0
    %383 = vmatprep.subr.mxu0 0.0
    %384 = vmatpush1.msra.mxu0 0.0
    %385 = vmatprep.subr.mxu0 0.0
    %386 = vmatpush1.msra.mxu0 0.0
    %387 = vmatprep.subr.mxu0 0.0
    %388 = vmatpush1.msra.mxu0 0.0
    %389 = vmatprep.subr.mxu0 0.0
    %390 = vmatpush1.msra.mxu0 0.0
    %391 = vmatprep.subr.mxu0 0.0
    %392 = vmatpush1.msra.mxu0 0.0
    %393 = vmatprep.subr.mxu0 0.0
    %394 = vmatpush1.msra.mxu0 0.0
    %395 = vmatprep.subr.mxu0 0.0
    %396 = vmatpush1.msra.mxu0 0.0
    %397 = vmatprep.subr.mxu0 0.0
    %398 = vmatpush1.msra.mxu0 0.0
    %399 = vmatprep.subr.mxu0 0.0
    %400 = vmatpush1.msra.mxu0 0.0
    %401 = vmatprep.subr.mxu0 0.0
    %402 = vmatpush1.msra.mxu0 0.0
    %403 = vmatprep.subr.mxu0 0.0
    %404 = vmatpush1.msra.mxu0 %v284
    %405 = vmatprep.subr.mxu0 0.0
    %406 = vmatpush1.msra.mxu0 %v283
    %407 = vmatprep.subr.mxu0 0.0
    %408 = vmatpush2.msra.mxu0 0.0
    %409 = vmatprep.subr.mxu0 0.0
    %410 = vmatpush2.msra.mxu0 0.0
    %411 = vmatprep.subr.mxu0 0.0
    %412 = vmatpush2.msra.mxu0 0.0
    %413 = vmatprep.subr.mxu0 0.0
    %414 = vmatpush2.msra.mxu0 0.0
    %415 = vmatprep.subr.mxu0 0.0
    %416 = vmatpush2.msra.mxu0 0.0
    %417 = vmatprep.subr.mxu0 0.0
    %418 = vmatpush2.msra.mxu0 0.0
    %419 = vmatprep.subr.mxu0 0.0
    %420 = vmatpush2.msra.mxu0 0.0
    %421 = vmatprep.subr.mxu0 0.0
    %422 = vmatpush2.msra.mxu0 0.0
    %423 = vmatprep.subr.mxu0 0.0
    %424 = vmatpush2.msra.mxu0 0.0
    %425 = vmatprep.subr.mxu0 0.0
    %426 = vmatpush2.msra.mxu0 0.0
    %427 = vmatprep.subr.mxu0 0.0
    %428 = vmatpush2.msra.mxu0 0.0
    %429 = vmatprep.subr.mxu0 0.0
    %430 = vmatpush2.msra.mxu0 0.0
    %431 = vmatprep.subr.mxu0 0.0
    %432 = vmatpush2.msra.mxu0 0.0
    %433 = vmatprep.subr.mxu0 0.0
    %434 = vmatpush2.msra.mxu0 0.0
    %435 = vmatprep.subr.mxu0 0.0
    %436 = vmatpush2.msra.mxu0 0.0
    %437 = vmatprep.subr.mxu0 0.0
    %438 = vmatpush2.msra.mxu0 0.0
    %439 = vmatprep.mubr.f32.mxu0 0.0
    %440 = vmatmul.mubr.f32.gmra.mxu0 %v373
    %v441 = vpop.f32.mrf.mxu0
    %v442 = vadd.f32 %v368, %v441
    %v443 = vpop.f32.mrf.mxu0
    %444 = vdwg.mxu0
    %v445 = vld [vmem:[%s8] sm:$0xff]
    %v446 = vld [vmem:[%s8 + $0x8] sm:$0xff]
    %v447 = vld [vmem:[%s8 + $0x10] sm:$0xff]
    %v448 = vld [vmem:[%s8 + $0x18] sm:$0xff]
    %v449 = vld [vmem:[%s8 + $0x20] sm:$0xff]
    %v450 = vld [vmem:[%s8 + $0x28] sm:$0xff]
    %v451 = vld [vmem:[%s8 + $0x30] sm:$0xff]
    %v452 = vld [vmem:[%s8 + $0x38] sm:$0xff]
    %v453 = vld [vmem:[%s8 + $0x40] sm:$0xff]
    %v454 = vld [vmem:[%s8 + $0x48] sm:$0xff]
    %v455 = vld [vmem:[%s8 + $0x50] sm:$0xff]
    %v456 = vld [vmem:[%s8 + $0x58] sm:$0xff]
    %v457 = vld [vmem:[%s8 + $0x60] sm:$0xff]
    %v458 = vld [vmem:[%s8 + $0x68] sm:$0xff]
    %v459 = vld [vmem:[%s8 + $0x70] sm:$0xff]
    %v460 = vld [vmem:[%s8 + $0x78] sm:$0xff]
    %461 = vmatprep.subr.mxu0 0.0
    %462 = vmatpush1.msra.mxu0 %v460
    %463 = vmatprep.subr.mxu0 0.0
    %464 = vmatpush1.msra.mxu0 %v459
    %465 = vmatprep.subr.mxu0 0.0
    %466 = vmatpush1.msra.mxu0 %v458
    %467 = vmatprep.subr.mxu0 0.0
    %468 = vmatpush1.msra.mxu0 %v457
    %469 = vmatprep.subr.mxu0 0.0
    %470 = vmatpush1.msra.mxu0 %v456
    %471 = vmatprep.subr.mxu0 0.0
    %472 = vmatpush1.msra.mxu0 %v455
    %473 = vmatprep.subr.mxu0 0.0
    %474 = vmatpush1.msra.mxu0 %v454
    %475 = vmatprep.subr.mxu0 0.0
    %476 = vmatpush1.msra.mxu0 %v453
    %477 = vmatprep.subr.mxu0 0.0
    %478 = vmatpush1.msra.mxu0 %v452
    %479 = vmatprep.subr.mxu0 0.0
    %480 = vmatpush1.msra.mxu0 %v451
    %481 = vmatprep.subr.mxu0 0.0
    %482 = vmatpush1.msra.mxu0 %v450
    %483 = vmatprep.subr.mxu0 0.0
    %484 = vmatpush1.msra.mxu0 %v449
    %485 = vmatprep.subr.mxu0 0.0
    %486 = vmatpush1.msra.mxu0 %v448
    %487 = vmatprep.subr.mxu0 0.0
    %488 = vmatpush1.msra.mxu0 %v447
    %489 = vmatprep.subr.mxu0 0.0
    %490 = vmatpush1.msra.mxu0 %v446
    %491 = vmatprep.subr.mxu0 0.0
    %492 = vmatpush1.msra.mxu0 %v445
    %493 = vmatprep.subr.mxu0 0.0
    %494 = vmatpush2.msra.mxu0 0.0
    %495 = vmatprep.subr.mxu0 0.0
    %496 = vmatpush2.msra.mxu0 0.0
    %497 = vmatprep.subr.mxu0 0.0
    %498 = vmatpush2.msra.mxu0 0.0
    %499 = vmatprep.subr.mxu0 0.0
    %500 = vmatpush2.msra.mxu0 0.0
    %501 = vmatprep.subr.mxu0 0.0
    %502 = vmatpush2.msra.mxu0 0.0
    %503 = vmatprep.subr.mxu0 0.0
    %504 = vmatpush2.msra.mxu0 0.0
    %505 = vmatprep.subr.mxu0 0.0
    %506 = vmatpush2.msra.mxu0 0.0
    %507 = vmatprep.subr.mxu0 0.0
    %508 = vmatpush2.msra.mxu0 0.0
    %509 = vmatprep.subr.mxu0 0.0
    %510 = vmatpush2.msra.mxu0 0.0
    %511 = vmatprep.subr.mxu0 0.0
    %512 = vmatpush2.msra.mxu0 0.0
    %513 = vmatprep.subr.mxu0 0.0
    %514 = vmatpush2.msra.mxu0 0.0
    %515 = vmatprep.subr.mxu0 0.0
    %516 = vmatpush2.msra.mxu0 0.0
    %517 = vmatprep.subr.mxu0 0.0
    %518 = vmatpush2.msra.mxu0 0.0
    %519 = vmatprep.subr.mxu0 0.0
    %520 = vmatpush2.msra.mxu0 0.0
    %521 = vmatprep.subr.mxu0 0.0
    %522 = vmatpush2.msra.mxu0 0.0
    %523 = vmatprep.subr.mxu0 0.0
    %524 = vmatpush2.msra.mxu0 0.0
    %525 = vmatprep.mubr.f32.mxu0 0.0
    %526 = vmatmul.mubr.f32.gmra.mxu0 %v279
    %v527 = vpop.f32.mrf.mxu0
    %v528 = vadd.f32 0.0, %v527
    %v529 = vpop.f32.mrf.mxu0
    %530 = vdwg.mxu0
    %v531 = vadd.f32 %v442, %v528
    %v532 = vlaneseq
    %v533 = vshrl.u32 %v532, 7
    %v534 = vsub.s32 4, %v533
    %v535 = vrot.slane %v42, %v534
    %v536 = vadd.f32 %v531, %v535
    %v537 = vmul.f32 %v536, 0.5
    %v538 = vmul.f32 %v536, 0.044715
    %v539 = vmul.f32 %v538, %v536
    %v540 = vmul.f32 %v539, %v536
    %v541 = vadd.f32 %v536, %v540
    %v542 = vmul.f32 %v541, 0.7978846
    %v543 = vtanh.pop %v542
    %v544 = vadd.f32 %v543, 1.0
    %v545 = vmul.f32 %v537, %v544
    %v546 = vld [vmem:[%s9] sm:$0xff]
    %v547 = vld [vmem:[%s9 + $0x8] sm:$0xff]
    %v548 = vld [vmem:[%s9 + $0x10] sm:$0xff]
    %v549 = vld [vmem:[%s9 + $0x18] sm:$0xff]
    %v550 = vlaneseq
    %v551 = vshrl.u32 %v550, 7
    %v552 = vsub.s32 5, %v551
    %v553 = vrot.slane %v42, %v552
    %vm554 = vcmask 261120
    %v556 = vsel %vm554, %v545, 0
    %558 = vmatprep.subr.mxu0 0.0
    %559 = vmatpush1.msra.mxu0 0.0
    %560 = vmatprep.subr.mxu0 0.0
    %561 = vmatpush1.msra.mxu0 0.0
    %562 = vmatprep.subr.mxu0 0.0
    %563 = vmatpush1.msra.mxu0 0.0
    %564 = vmatprep.subr.mxu0 0.0
    %565 = vmatpush1.msra.mxu0 0.0
    %566 = vmatprep.subr.mxu0 0.0
    %567 = vmatpush1.msra.mxu0 0.0
    %568 = vmatprep.subr.mxu0 0.0
    %569 = vmatpush1.msra.mxu0 0.0
    %570 = vmatprep.subr.mxu0 0.0
    %571 = vmatpush1.msra.mxu0 0.0
    %572 = vmatprep.subr.mxu0 0.0
    %573 = vmatpush1.msra.mxu0 0.0
    %574 = vmatprep.subr.mxu0 0.0
    %575 = vmatpush1.msra.mxu0 0.0
    %576 = vmatprep.subr.mxu0 0.0
    %577 = vmatpush1.msra.mxu0 0.0
    %578 = vmatprep.subr.mxu0 0.0
    %579 = vmatpush1.msra.mxu0 0.0
    %580 = vmatprep.subr.mxu0 0.0
    %581 = vmatpush1.msra.mxu0 0.0
    %582 = vmatprep.subr.mxu0 0.0
    %583 = vmatpush1.msra.mxu0 %v549
    %584 = vmatprep.subr.mxu0 0.0
    %585 = vmatpush1.msra.mxu0 %v548
    %586 = vmatprep.subr.mxu0 0.0
    %587 = vmatpush1.msra.mxu0 %v547
    %588 = vmatprep.subr.mxu0 0.0
    %589 = vmatpush1.msra.mxu0 %v546
    %590 = vmatprep.subr.mxu0 0.0
    %591 = vmatpush2.msra.mxu0 0.0
    %592 = vmatprep.subr.mxu0 0.0
    %593 = vmatpush2.msra.mxu0 0.0
    %594 = vmatprep.subr.mxu0 0.0
    %595 = vmatpush2.msra.mxu0 0.0
    %596 = vmatprep.subr.mxu0 0.0
    %597 = vmatpush2.msra.mxu0 0.0
    %598 = vmatprep.subr.mxu0 0.0
    %599 = vmatpush2.msra.mxu0 0.0
    %600 = vmatprep.subr.mxu0 0.0
    %601 = vmatpush2.msra.mxu0 0.0
    %602 = vmatprep.subr.mxu0 0.0
    %603 = vmatpush2.msra.mxu0 0.0
    %604 = vmatprep.subr.mxu0 0.0
    %605 = vmatpush2.msra.mxu0 0.0
    %606 = vmatprep.subr.mxu0 0.0
    %607 = vmatpush2.msra.mxu0 0.0
    %608 = vmatprep.subr.mxu0 0.0
    %609 = vmatpush2.msra.mxu0 0.0
    %610 = vmatprep.subr.mxu0 0.0
    %611 = vmatpush2.msra.mxu0 0.0
    %612 = vmatprep.subr.mxu0 0.0
    %613 = vmatpush2.msra.mxu0 0.0
    %614 = vmatprep.subr.mxu0 0.0
    %615 = vmatpush2.msra.mxu0 0.0
    %616 = vmatprep.subr.mxu0 0.0
    %617 = vmatpush2.msra.mxu0 0.0
    %618 = vmatprep.subr.mxu0 0.0
    %619 = vmatpush2.msra.mxu0 0.0
    %620 = vmatprep.subr.mxu0 0.0
    %621 = vmatpush2.msra.mxu0 0.0
    %622 = vmatprep.mubr.f32.mxu0 0.0
    %623 = vmatmul.mubr.f32.gmra.mxu0 %v556
    %v624 = vpop.f32.mrf.mxu0
    %v625 = vadd.f32 %v553, %v624
    %v626 = vpop.f32.mrf.mxu0
    %627 = vdwg.mxu0
    %v628 = vmul.f32 %v625, 0.5
    %v629 = vmul.f32 %v625, 0.044715
    %v630 = vmul.f32 %v629, %v625
    %v631 = vmul.f32 %v630, %v625
    %v632 = vadd.f32 %v625, %v631
    %v633 = vmul.f32 %v632, 0.7978846
    %v634 = vtanh.pop %v633
    %v635 = vadd.f32 %v634, 1.0
    %v636 = vmul.f32 %v628, %v635
    %v637 = vld [vmem:[%s10] sm:$0xff]
    %v638 = vld [vmem:[%s10 + $0x8] sm:$0xff]
    %v639 = vld [vmem:[%s10 + $0x10] sm:$0xff]
    %v640 = vld [vmem:[%s10 + $0x18] sm:$0xff]
    %v641 = vlaneseq
    %v642 = vshrl.u32 %v641, 7
    %v643 = vsub.s32 6, %v642
    %v644 = vrot.slane %v42, %v643
    %v646 = vsel %vm554, %v636, 0
    %648 = vmatprep.subr.mxu0 0.0
    %649 = vmatpush1.msra.mxu0 0.0
    %650 = vmatprep.subr.mxu0 0.0
    %651 = vmatpush1.msra.mxu0 0.0
    %652 = vmatprep.subr.mxu0 0.0
    %653 = vmatpush1.msra.mxu0 0.0
    %654 = vmatprep.subr.mxu0 0.0
    %655 = vmatpush1.msra.mxu0 0.0
    %656 = vmatprep.subr.mxu0 0.0
    %657 = vmatpush1.msra.mxu0 0.0
    %658 = vmatprep.subr.mxu0 0.0
    %659 = vmatpush1.msra.mxu0 0.0
    %660 = vmatprep.subr.mxu0 0.0
    %661 = vmatpush1.msra.mxu0 0.0
    %662 = vmatprep.subr.mxu0 0.0
    %663 = vmatpush1.msra.mxu0 0.0
    %664 = vmatprep.subr.mxu0 0.0
    %665 = vmatpush1.msra.mxu0 0.0
    %666 = vmatprep.subr.mxu0 0.0
    %667 = vmatpush1.msra.mxu0 0.0
    %668 = vmatprep.subr.mxu0 0.0
    %669 = vmatpush1.msra.mxu0 0.0
    %670 = vmatprep.subr.mxu0 0.0
    %671 = vmatpush1.msra.mxu0 0.0
    %672 = vmatprep.subr.mxu0 0.0
    %673 = vmatpush1.msra.mxu0 %v640
    %674 = vmatprep.subr.mxu0 0.0
    %675 = vmatpush1.msra.mxu0 %v639
    %676 = vmatprep.subr.mxu0 0.0
    %677 = vmatpush1.msra.mxu0 %v638
    %678 = vmatprep.subr.mxu0 0.0
    %679 = vmatpush1.msra.mxu0 %v637
    %680 = vmatprep.subr.mxu0 0.0
    %681 = vmatpush2.msra.mxu0 0.0
    %682 = vmatprep.subr.mxu0 0.0
    %683 = vmatpush2.msra.mxu0 0.0
    %684 = vmatprep.subr.mxu0 0.0
    %685 = vmatpush2.msra.mxu0 0.0
    %686 = vmatprep.subr.mxu0 0.0
    %687 = vmatpush2.msra.mxu0 0.0
    %688 = vmatprep.subr.mxu0 0.0
    %689 = vmatpush2.msra.mxu0 0.0
    %690 = vmatprep.subr.mxu0 0.0
    %691 = vmatpush2.msra.mxu0 0.0
    %692 = vmatprep.subr.mxu0 0.0
    %693 = vmatpush2.msra.mxu0 0.0
    %694 = vmatprep.subr.mxu0 0.0
    %695 = vmatpush2.msra.mxu0 0.0
    %696 = vmatprep.subr.mxu0 0.0
    %697 = vmatpush2.msra.mxu0 0.0
    %698 = vmatprep.subr.mxu0 0.0
    %699 = vmatpush2.msra.mxu0 0.0
    %700 = vmatprep.subr.mxu0 0.0
    %701 = vmatpush2.msra.mxu0 0.0
    %702 = vmatprep.subr.mxu0 0.0
    %703 = vmatpush2.msra.mxu0 0.0
    %704 = vmatprep.subr.mxu0 0.0
    %705 = vmatpush2.msra.mxu0 0.0
    %706 = vmatprep.subr.mxu0 0.0
    %707 = vmatpush2.msra.mxu0 0.0
    %708 = vmatprep.subr.mxu0 0.0
    %709 = vmatpush2.msra.mxu0 0.0
    %710 = vmatprep.subr.mxu0 0.0
    %711 = vmatpush2.msra.mxu0 0.0
    %712 = vmatprep.mubr.f32.mxu0 0.0
    %713 = vmatmul.mubr.f32.gmra.mxu0 %v646
    %v714 = vpop.f32.mrf.mxu0
    %v715 = vadd.f32 %v644, %v714
    %v716 = vpop.f32.mrf.mxu0
    %717 = vdwg.mxu0
    %v718 = vsel %vm554, %v715, 0.0
    %719 = vadd.xlane.f32.xlu0 %v718
    %v720 = vpop.xlane.xlu0 %719
    %v721 = vrcp.pop 32.0
    %v722 = vmul.f32 %v720, %v721
    %v723 = vsub.f32 %v715, %v722
    %v724 = vmul.f32 %v723, %v723
    %v725 = vsel %vm554, %v724, 0.0
    %726 = vadd.xlane.f32.xlu0 %v725
    %v727 = vpop.xlane.xlu0 %726
    %v728 = vmul.f32 %v727, %v721
    %v729 = vadd.f32 %v728, 1e-05
    %v730 = vrsqrt.pop %v729
    %v731 = vmul.f32 %v723, %v730
    %v732 = vlaneseq
    %v733 = vshrl.u32 %v732, 7
    %v734 = vsub.s32 7, %v733
    %v735 = vrot.slane %v42, %v734
    %v736 = vmul.f32 %v731, %v735
    %v737 = vlaneseq
    %v738 = vshrl.u32 %v737, 7
    %v739 = vsub.s32 0, %v738
    %v740 = vrot.slane %v43, %v739
    %v741 = vadd.f32 %v736, %v740
    %v742 = vmul.f32 %v741, 0.5
    %v743 = vmul.f32 %v741, 0.044715
    %v744 = vmul.f32 %v743, %v741
    %v745 = vmul.f32 %v744, %v741
    %v746 = vadd.f32 %v741, %v745
    %v747 = vmul.f32 %v746, 0.7978846
    %v748 = vtanh.pop %v747
    %v749 = vadd.f32 %v748, 1.0
    %v750 = vmul.f32 %v742, %v749
    %v751 = vld [vmem:[%s11] sm:$0xff]
    %v752 = vld [vmem:[%s11 + $0x8] sm:$0xff]
    %v753 = vld [vmem:[%s11 + $0x10] sm:$0xff]
    %v754 = vld [vmem:[%s11 + $0x18] sm:$0xff]
    %v755 = vlaneseq
    %v756 = vshrl.u32 %v755, 7
    %v757 = vsub.s32 1, %v756
    %v758 = vrot.slane %v43, %v757
    %v760 = vsel %vm554, %v750, 0
    %762 = vmatprep.subr.mxu0 0.0
    %763 = vmatpush1.msra.mxu0 0.0
    %764 = vmatprep.subr.mxu0 0.0
    %765 = vmatpush1.msra.mxu0 0.0
    %766 = vmatprep.subr.mxu0 0.0
    %767 = vmatpush1.msra.mxu0 0.0
    %768 = vmatprep.subr.mxu0 0.0
    %769 = vmatpush1.msra.mxu0 0.0
    %770 = vmatprep.subr.mxu0 0.0
    %771 = vmatpush1.msra.mxu0 0.0
    %772 = vmatprep.subr.mxu0 0.0
    %773 = vmatpush1.msra.mxu0 0.0
    %774 = vmatprep.subr.mxu0 0.0
    %775 = vmatpush1.msra.mxu0 0.0
    %776 = vmatprep.subr.mxu0 0.0
    %777 = vmatpush1.msra.mxu0 0.0
    %778 = vmatprep.subr.mxu0 0.0
    %779 = vmatpush1.msra.mxu0 0.0
    %780 = vmatprep.subr.mxu0 0.0
    %781 = vmatpush1.msra.mxu0 0.0
    %782 = vmatprep.subr.mxu0 0.0
    %783 = vmatpush1.msra.mxu0 0.0
    %784 = vmatprep.subr.mxu0 0.0
    %785 = vmatpush1.msra.mxu0 0.0
    %786 = vmatprep.subr.mxu0 0.0
    %787 = vmatpush1.msra.mxu0 %v754
    %788 = vmatprep.subr.mxu0 0.0
    %789 = vmatpush1.msra.mxu0 %v753
    %790 = vmatprep.subr.mxu0 0.0
    %791 = vmatpush1.msra.mxu0 %v752
    %792 = vmatprep.subr.mxu0 0.0
    %793 = vmatpush1.msra.mxu0 %v751
    %794 = vmatprep.subr.mxu0 0.0
    %795 = vmatpush2.msra.mxu0 0.0
    %796 = vmatprep.subr.mxu0 0.0
    %797 = vmatpush2.msra.mxu0 0.0
    %798 = vmatprep.subr.mxu0 0.0
    %799 = vmatpush2.msra.mxu0 0.0
    %800 = vmatprep.subr.mxu0 0.0
    %801 = vmatpush2.msra.mxu0 0.0
    %802 = vmatprep.subr.mxu0 0.0
    %803 = vmatpush2.msra.mxu0 0.0
    %804 = vmatprep.subr.mxu0 0.0
    %805 = vmatpush2.msra.mxu0 0.0
    %806 = vmatprep.subr.mxu0 0.0
    %807 = vmatpush2.msra.mxu0 0.0
    %808 = vmatprep.subr.mxu0 0.0
    %809 = vmatpush2.msra.mxu0 0.0
    %810 = vmatprep.subr.mxu0 0.0
    %811 = vmatpush2.msra.mxu0 0.0
    %812 = vmatprep.subr.mxu0 0.0
    %813 = vmatpush2.msra.mxu0 0.0
    %814 = vmatprep.subr.mxu0 0.0
    %815 = vmatpush2.msra.mxu0 0.0
    %816 = vmatprep.subr.mxu0 0.0
    %817 = vmatpush2.msra.mxu0 0.0
    %818 = vmatprep.subr.mxu0 0.0
    %819 = vmatpush2.msra.mxu0 0.0
    %820 = vmatprep.subr.mxu0 0.0
    %821 = vmatpush2.msra.mxu0 0.0
    %822 = vmatprep.subr.mxu0 0.0
    %823 = vmatpush2.msra.mxu0 0.0
    %824 = vmatprep.subr.mxu0 0.0
    %825 = vmatpush2.msra.mxu0 0.0
    %826 = vmatprep.mubr.f32.mxu0 0.0
    %827 = vmatmul.mubr.f32.gmra.mxu0 %v760
    %v828 = vpop.f32.mrf.mxu0
    %v829 = vadd.f32 %v758, %v828
    %v830 = vpop.f32.mrf.mxu0
    %831 = vdwg.mxu0
    %832 = vst [vmem:[#allocation2] sm:$0xff] %v829
    // Predicated region
    $region50: #{conditional_qflow_forward.1} parent=1 // pred_check
      _
    $region51: #{conditional_qflow_forward.1} parent=1 // pred_check_branch
      %834 = sbr.rel (0) target = $region53
    $region52: #{conditional_qflow_forward.1} parent=1 // pred_region
      %s836 = ssub.s32 128, 128
      %837 = vsyncadd [#allocation3], %s836
      %s839 = sshll.u32 [#allocation2], 4
      %s840 = int_to_ptr.vmem [resolvable:$true] %s839
      %842 = dma.vmem_to_hbm [thread:$0]  %s840, 128, %s12, [#allocation3]
    $region53: #{conditional_qflow_forward.1} parent=1 // pred_fallthru
      _
    // Predicated region
    $region54: #{conditional_qflow_forward.1} parent=1 // pred_check
      _
    $region55: #{conditional_qflow_forward.1} parent=1 // pred_check_branch
      %844 = sbr.rel (0) target = $region57
    $region56: #{conditional_qflow_forward.1} parent=1 // pred_region
      %845 = dma.done [#allocation3], 128
    $region57: #{conditional_qflow_forward.1} parent=1 // pred_fallthru
      _
    %846 = vsyncpa [#allocation3], 1

</llo_original>
